<compile_context>
chip_gen: v7x
topology: tpu7x:2x2x1
jax: 0.10.0
libtpu: 0.0.40
codegen_flags: <defaults>
</compile_context>

<pallas_src>
import jax
import jax.numpy as jnp
from jax.experimental import pallas as pl
from jax.experimental.pallas import tpu as pltpu


def _round_up(x, m):
    return ((x + m - 1) // m) * m


def _softplus(x):
    # Numerically-stable softplus matching torch.nn.Softplus (beta=1, threshold=20).
    # Like PyTorch f32 it can underflow to 0.0 for x < ~-103 (parity with the spec).
    return jnp.where(x > 20.0, x, jnp.log1p(jnp.exp(jnp.minimum(x, 20.0))))


def _mbpo_reward_kernel(xT_ref, w1_ref, w23_ref, w4_ref, bias_ref, out_ref):
    # Shapes (batch-on-lanes layout):
    #   xT_ref   : (S+A, Bt)  bf16       w1_ref  : (2H, S+A)  bf16
    #   w23_ref  : (2, 2H, 2H) bf16 (block-diag layers 2 & 3, transposed)
    #   w4_ref   : (2, 2H)    bf16       bias_ref: (2H, 4)    f32
    #   out_ref  : (2, Bt)    f32   row 0 = mean, row 1 = std
    b = bias_ref[...]                                            # (2H, 4) f32

    # Layer 1 (fused heads), single K=(S+A) contraction.
    h = jnp.dot(w1_ref[...], xT_ref[...], preferred_element_type=jnp.float32)
    h = jnp.maximum(h + b[:, 0:1], 0.0)                          # (2H, Bt) f32

    # Layers 2 / 3 (block-diagonal keeps mean/std halves independent).
    h = jnp.dot(w23_ref[0], h.astype(jnp.bfloat16),
                preferred_element_type=jnp.float32)
    h = jnp.maximum(h + b[:, 1:2], 0.0)
    h = jnp.dot(w23_ref[1], h.astype(jnp.bfloat16),
                preferred_element_type=jnp.float32)
    h = jnp.maximum(h + b[:, 2:3], 0.0)

    # Layer 4: (2, 2H) @ (2H, Bt) -> (2, Bt); row 0 = mean, row 1 = pre-softplus std.
    o = jnp.dot(w4_ref[...], h.astype(jnp.bfloat16),
                preferred_element_type=jnp.float32) + b[0:2, 3:4]

    row = jax.lax.broadcasted_iota(jnp.int32, o.shape, 0)
    out_ref[...] = jnp.where(row == 0, o, _softplus(o))


def _block_diag(a, c):
    za = jnp.zeros((a.shape[0], c.shape[1]), a.dtype)
    zc = jnp.zeros((c.shape[0], a.shape[1]), a.dtype)
    return jnp.concatenate(
        [jnp.concatenate([a, za], axis=1), jnp.concatenate([zc, c], axis=1)], axis=0)


def pack_params(params):
    """Fuse the two heads' 16 (w, b) tensors into 4 kernel operands (done once).

    Weights are pre-cast to bf16 (MXU-native on v6e/v7x); biases stay f32.
    """
    (w1m, b1m, w2m, b2m, w3m, b3m, w4m, b4m,
     w1s, b1s, w2s, b2s, w3s, b3s, w4s, b4s) = params
    H2 = w1m.shape[1] + w1s.shape[1]                    # fused hidden width (2H)

    # Layer 1: concat along outputs, transpose -> (2H, S+A).
    w1T = jnp.transpose(jnp.concatenate([w1m, w1s], axis=1)).astype(jnp.bfloat16)

    # Layers 2 / 3: block-diagonal, transposed, stacked -> (2, 2H, 2H).
    w23T = jnp.stack([jnp.transpose(_block_diag(w2m, w2s)),
                      jnp.transpose(_block_diag(w3m, w3s))]).astype(jnp.bfloat16)

    # Layer 4: block-diagonal (2H, 2), transposed -> (2, 2H).
    w4T = jnp.transpose(_block_diag(w4m, w4s)).astype(jnp.bfloat16)

    # Biases packed as columns of a (2H, 4) f32 slab (b4 zero-padded to 2H rows).
    b1 = jnp.concatenate([b1m, b1s], axis=1).reshape(-1)               # (2H,)
    b2 = jnp.concatenate([b2m, b2s], axis=1).reshape(-1)
    b3 = jnp.concatenate([b3m, b3s], axis=1).reshape(-1)
    b4 = jnp.concatenate([b4m, b4s], axis=1).reshape(-1)               # (2,)
    b4p = jnp.zeros((H2,), jnp.float32).at[:2].set(b4)
    bias = jnp.stack([b1, b2, b3, b4p], axis=1).astype(jnp.float32)    # (2H, 4)

    return (w1T, w23T, w4T, bias)


def mbpo_reward_forward(state, action, packed):
    """Returns (mean, std) of the predicted reward distribution. Shapes (B, 1)."""
    B, S = state.shape
    A = action.shape[1]
    w1T, w23T, w4T, bias = packed
    H2 = w1T.shape[0]
    SA = S + A

    # Batch tile: large fixed tile (amortizes ~0.35us/step overhead), multiple of
    # 128, capped so there are >= 2 grid steps when B >= 256 (v7x has 2 TCs).
    preferred_tile = 2048
    B128 = _round_up(B, 128)
    b_tile = min(preferred_tile, max(128, _round_up(pl.cdiv(B128, 2), 128)))
    B_pad = _round_up(B, b_tile)
    grid = (B_pad // b_tile,)

    # Single fused concat + transpose + bf16 cast -> lane-dense (S+A, B) slab.
    xT = jnp.transpose(jnp.concatenate([state, action], axis=1)).astype(jnp.bfloat16)
    if B_pad != B:
        xT = jnp.pad(xT, ((0, 0), (0, B_pad - B)))      # zero cols: harmless filler

    weight_elems = H2 * SA + 2 * H2 * H2 + 2 * H2
    cost = pl.CostEstimate(
        flops=2 * B_pad * (SA * H2 + 2 * H2 * H2 + H2 * 2),
        transcendentals=4 * B_pad,
        bytes_accessed=2 * (B_pad * SA + weight_elems) + 4 * (2 * B_pad + H2 * 4),
    )

    # TODO(synk): if a profile shows exposed input DMA at this tile, set
    # pipeline_mode=pl.Buffered(3) on the xT BlockSpec (tiny VMEM cost).
    out = pl.pallas_call(
        _mbpo_reward_kernel,
        out_shape=jax.ShapeDtypeStruct((2, B_pad), jnp.float32),
        grid=grid,
        in_specs=[
            pl.BlockSpec((SA, b_tile), lambda i: (0, i)),
            # Weights/biases: full blocks, constant index_map -> resident in VMEM.
            pl.BlockSpec((H2, SA), lambda i: (0, 0)),
            pl.BlockSpec((2, H2, H2), lambda i: (0, 0, 0)),
            pl.BlockSpec((2, H2), lambda i: (0, 0)),
            pl.BlockSpec((H2, 4), lambda i: (0, 0)),
        ],
        out_specs=pl.BlockSpec((2, b_tile), lambda i: (0, i)),
        compiler_params=pltpu.CompilerParams(dimension_semantics=("parallel",)),
        cost_estimate=cost,
    )(xT, w1T, w23T, w4T, bias)

    mean = out[0, :B][:, None]                          # (B, 1)
    std = out[1, :B][:, None]                           # (B, 1)
    return mean, std


def init_params(key, input_size, hidden_size):
    """Deterministic init mirroring torch.nn.Linear default (U(-1/sqrt(fan_in), +))."""
    dims = [input_size] + list(hidden_size) + [1]
    params = []
    for _head in range(2):  # mean head, std head
        for i in range(4):
            fan_in, fan_out = dims[i], dims[i + 1]
            key, kw, kb = jax.random.split(key, 3)
            bound = 1.0 / jnp.sqrt(jnp.float32(fan_in))
            w = jax.random.uniform(kw, (fan_in, fan_out), jnp.float32, -bound, bound)
            b = jax.random.uniform(kb, (1, fan_out), jnp.float32, -bound, bound)
            params += [w, b]
    return params


if __name__ == "__main__":
    # Pendulum-like dims: state=3, action=1 -> input_size=4, hidden=[32, 32, 32]
    key = jax.random.PRNGKey(0)
    k_state, k_action, k_params = jax.random.split(key, 3)

    B = 8
    state_dim, action_dim = 3, 1
    hidden = (32, 32, 32)

    state = jax.random.normal(k_state, (B, state_dim), jnp.float32)
    action = jax.random.normal(k_action, (B, action_dim), jnp.float32)
    params = init_params(k_params, state_dim + action_dim, hidden)
    packed = pack_params(params)

    fwd = jax.jit(mbpo_reward_forward)
    mean, std = fwd(state, action, packed)
    jax.block_until_ready((mean, std))

    # Pure-JAX f32 reference (original per-head math, un-fused). Tolerance is
    # loosened vs. the f32 reference because the kernel runs its dots in bf16.
    x = jnp.concatenate([state, action], axis=1)

    def ref_head(p):
        h = x
        for i in range(3):
            h = jnp.maximum(h @ p[2 * i] + p[2 * i + 1], 0.0)
        return h @ p[6] + p[7]

    ref_mean = ref_head(params[0:8])
    ref_std = jax.nn.softplus(ref_head(params[8:16]))
    assert mean.shape == (B, 1) and std.shape == (B, 1)
    assert jnp.allclose(mean, ref_mean, atol=3e-2, rtol=3e-2), "mean mismatch"
    assert jnp.allclose(std, ref_std, atol=3e-2, rtol=3e-2), "std mismatch"
    assert std.min() > 0.0

    print("KERNEL_OK")
</pallas_src>

<mosaic_0001>
module attributes {stable_mosaic.version = 11 : i64} {
  func.func @_mbpo_reward_kernel(%arg0: i32, %arg1: memref<4x128xbf16, #tpu.memory_space<vmem>>, %arg2: memref<64x4xbf16, #tpu.memory_space<vmem>>, %arg3: memref<2x64x64xbf16, #tpu.memory_space<vmem>>, %arg4: memref<2x64xbf16, #tpu.memory_space<vmem>>, %arg5: memref<64x4xf32, #tpu.memory_space<vmem>>, %arg6: memref<2x128xf32, #tpu.memory_space<vmem>>) attributes {dimension_semantics = [#tpu.dimension_semantics<parallel>], iteration_bounds = array<i64: 1>, scalar_prefetch = 0 : i64, scratch_operands = 0 : i64, tpu.core_type = #tpu.core_type<tc>, window_params = [{transform_indices = @transform_0, window_bounds = array<i64: 4, 128>}, {pipeline_mode = #tpu.pipeline_mode<synchronous>, transform_indices = @transform_1, window_bounds = array<i64: 64, 4>}, {pipeline_mode = #tpu.pipeline_mode<synchronous>, transform_indices = @transform_2, window_bounds = array<i64: 2, 64, 64>}, {pipeline_mode = #tpu.pipeline_mode<synchronous>, transform_indices = @transform_3, window_bounds = array<i64: 2, 64>}, {pipeline_mode = #tpu.pipeline_mode<synchronous>, transform_indices = @transform_4, window_bounds = array<i64: 64, 4>}, {transform_indices = @transform_5, window_bounds = array<i64: 2, 128>}]} {
    %c0 = arith.constant 0 : index
    %c0_0 = arith.constant 0 : index
    %0 = vector.load %arg5[%c0, %c0_0] : memref<64x4xf32, #tpu.memory_space<vmem>>, vector<64x4xf32>
    %c0_1 = arith.constant 0 : index
    %c0_2 = arith.constant 0 : index
    %1 = vector.load %arg2[%c0_1, %c0_2] : memref<64x4xbf16, #tpu.memory_space<vmem>>, vector<64x4xbf16>
    %c0_3 = arith.constant 0 : index
    %c0_4 = arith.constant 0 : index
    %2 = vector.load %arg1[%c0_3, %c0_4] : memref<4x128xbf16, #tpu.memory_space<vmem>>, vector<4x128xbf16>
    %cst = arith.constant dense<0.000000e+00> : vector<64x128xf32>
    %3 = tpu.matmul %1, %2, %cst {dimension_numbers = #tpu.dot_dimension_numbers<[1], [0], [0], [1], [0, 0, 1, 1], [], []>} : vector<64x4xbf16>, vector<4x128xbf16>, vector<64x128xf32> -> vector<64x128xf32>
    %4 = vector.extract_strided_slice %0 {offsets = [0, 0], sizes = [64, 1], strides = [1, 1]} : vector<64x4xf32> to vector<64x1xf32>
    %5 = vector.broadcast %4 : vector<64x1xf32> to vector<64x128xf32>
    %6 = arith.addf %3, %5 : vector<64x128xf32>
    %cst_5 = arith.constant 0.000000e+00 : f32
    %7 = vector.broadcast %cst_5 : f32 to vector<64x128xf32>
    %8 = arith.maximumf %6, %7 : vector<64x128xf32>
    %c0_6 = arith.constant 0 : index
    %c0_7 = arith.constant 0 : index
    %c0_8 = arith.constant 0 : index
    %9 = vector.load %arg3[%c0_6, %c0_7, %c0_8] : memref<2x64x64xbf16, #tpu.memory_space<vmem>>, vector<1x64x64xbf16>
    %10 = vector.shape_cast %9 : vector<1x64x64xbf16> to vector<64x64xbf16>
    %11 = arith.truncf %8 : vector<64x128xf32> to vector<64x128xbf16>
    %cst_9 = arith.constant dense<0.000000e+00> : vector<64x128xf32>
    %12 = tpu.matmul %10, %11, %cst_9 {dimension_numbers = #tpu.dot_dimension_numbers<[1], [0], [0], [1], [0, 0, 1, 1], [], []>} : vector<64x64xbf16>, vector<64x128xbf16>, vector<64x128xf32> -> vector<64x128xf32>
    %13 = vector.extract_strided_slice %0 {offsets = [0, 1], sizes = [64, 1], strides = [1, 1]} : vector<64x4xf32> to vector<64x1xf32>
    %14 = vector.broadcast %13 : vector<64x1xf32> to vector<64x128xf32>
    %15 = arith.addf %12, %14 : vector<64x128xf32>
    %cst_10 = arith.constant 0.000000e+00 : f32
    %16 = vector.broadcast %cst_10 : f32 to vector<64x128xf32>
    %17 = arith.maximumf %15, %16 : vector<64x128xf32>
    %c1 = arith.constant 1 : index
    %c0_11 = arith.constant 0 : index
    %c0_12 = arith.constant 0 : index
    %18 = vector.load %arg3[%c1, %c0_11, %c0_12] : memref<2x64x64xbf16, #tpu.memory_space<vmem>>, vector<1x64x64xbf16>
    %19 = vector.shape_cast %18 : vector<1x64x64xbf16> to vector<64x64xbf16>
    %20 = arith.truncf %17 : vector<64x128xf32> to vector<64x128xbf16>
    %cst_13 = arith.constant dense<0.000000e+00> : vector<64x128xf32>
    %21 = tpu.matmul %19, %20, %cst_13 {dimension_numbers = #tpu.dot_dimension_numbers<[1], [0], [0], [1], [0, 0, 1, 1], [], []>} : vector<64x64xbf16>, vector<64x128xbf16>, vector<64x128xf32> -> vector<64x128xf32>
    %22 = vector.extract_strided_slice %0 {offsets = [0, 2], sizes = [64, 1], strides = [1, 1]} : vector<64x4xf32> to vector<64x1xf32>
    %23 = vector.broadcast %22 : vector<64x1xf32> to vector<64x128xf32>
    %24 = arith.addf %21, %23 : vector<64x128xf32>
    %cst_14 = arith.constant 0.000000e+00 : f32
    %25 = vector.broadcast %cst_14 : f32 to vector<64x128xf32>
    %26 = arith.maximumf %24, %25 : vector<64x128xf32>
    %c0_15 = arith.constant 0 : index
    %c0_16 = arith.constant 0 : index
    %27 = vector.load %arg4[%c0_15, %c0_16] : memref<2x64xbf16, #tpu.memory_space<vmem>>, vector<2x64xbf16>
    %28 = arith.truncf %26 : vector<64x128xf32> to vector<64x128xbf16>
    %cst_17 = arith.constant dense<0.000000e+00> : vector<2x128xf32>
    %29 = tpu.matmul %27, %28, %cst_17 {dimension_numbers = #tpu.dot_dimension_numbers<[1], [0], [0], [1], [0, 0, 1, 1], [], []>} : vector<2x64xbf16>, vector<64x128xbf16>, vector<2x128xf32> -> vector<2x128xf32>
    %30 = vector.extract_strided_slice %0 {offsets = [0, 3], sizes = [2, 1], strides = [1, 1]} : vector<64x4xf32> to vector<2x1xf32>
    %31 = vector.broadcast %30 : vector<2x1xf32> to vector<2x128xf32>
    %32 = arith.addf %29, %31 : vector<2x128xf32>
    %33 = tpu.iota {dimensions = array<i32: 0>} : vector<2x128xi32>
    %c0_i32 = arith.constant 0 : i32
    %34 = vector.broadcast %c0_i32 : i32 to vector<2x128xi32>
    %35 = arith.cmpi eq, %33, %34 : vector<2x128xi32>
    %cst_18 = arith.constant 2.000000e+01 : f32
    %36 = vector.broadcast %cst_18 : f32 to vector<2x128xf32>
    %37 = arith.cmpf ogt, %32, %36 : vector<2x128xf32>
    %cst_19 = arith.constant 2.000000e+01 : f32
    %38 = vector.broadcast %cst_19 : f32 to vector<2x128xf32>
    %39 = arith.minimumf %32, %38 : vector<2x128xf32>
    %40 = math.exp %39 : vector<2x128xf32>
    %41 = math.log1p %40 : vector<2x128xf32>
    %42 = arith.select %37, %32, %41 : vector<2x128xi1>, vector<2x128xf32>
    %43 = arith.select %35, %32, %42 : vector<2x128xi1>, vector<2x128xf32>
    %c0_20 = arith.constant 0 : index
    %c0_21 = arith.constant 0 : index
    %44 = vector.load %arg6[%c0_20, %c0_21] : memref<2x128xf32, #tpu.memory_space<vmem>>, vector<2x128xf32>
    tpu.vector_store %arg6[%c0_20, %c0_21], %43 {strides = array<i32>} : memref<2x128xf32, #tpu.memory_space<vmem>>, vector<2x128xf32>,
    return
  }
  func.func @transform_0(%arg0: i32) -> (i32, i32) {
    %c0_i32 = arith.constant 0 : i32
    %c0_i32_0 = arith.constant 0 : i32
    return %c0_i32, %arg0 : i32, i32
  }
  func.func @transform_1(%arg0: i32) -> (i32, i32) {
    %c0_i32 = arith.constant 0 : i32
    %c0_i32_0 = arith.constant 0 : i32
    %c0_i32_1 = arith.constant 0 : i32
    return %c0_i32, %c0_i32_0 : i32, i32
  }
  func.func @transform_2(%arg0: i32) -> (i32, i32, i32) {
    %c0_i32 = arith.constant 0 : i32
    %c0_i32_0 = arith.constant 0 : i32
    %c0_i32_1 = arith.constant 0 : i32
    %c0_i32_2 = arith.constant 0 : i32
    return %c0_i32, %c0_i32_0, %c0_i32_1 : i32, i32, i32
  }
  func.func @transform_3(%arg0: i32) -> (i32, i32) {
    %c0_i32 = arith.constant 0 : i32
    %c0_i32_0 = arith.constant 0 : i32
    %c0_i32_1 = arith.constant 0 : i32
    return %c0_i32, %c0_i32_0 : i32, i32
  }
  func.func @transform_4(%arg0: i32) -> (i32, i32) {
    %c0_i32 = arith.constant 0 : i32
    %c0_i32_0 = arith.constant 0 : i32
    %c0_i32_1 = arith.constant 0 : i32
    return %c0_i32, %c0_i32_0 : i32, i32
  }
  func.func @transform_5(%arg0: i32) -> (i32, i32) {
    %c0_i32 = arith.constant 0 : i32
    %c0_i32_0 = arith.constant 0 : i32
    return %c0_i32, %arg0 : i32, i32
  }
}

</mosaic_0001>

<llo_original>
// kernel: mbpo_reward_forward.1
$region0: #{mbpo_reward_forward.1}
  #allocation0 [shape = 'u32[]', space=smem, size = 0x4, offset = 0x4, fixed_abs, tag = 'smem constant byte address 0x4 - core index']
  #allocation1 [shape = 'u32[144,128]{1,0:T(1,128)}', space=vmem, size = 0x12000, scoped, tag = 'internal scratch']
  %s0 = inlined_call_operand.vmem [shape: bf16[4,128], index: 0, kind: input, shape index: {}]
  %s1 = inlined_call_operand.vmem [shape: bf16[64,4], index: 1, kind: input, shape index: {}]
  %s2 = inlined_call_operand.vmem [shape: bf16[2,64,64], index: 2, kind: input, shape index: {}]
  %s3 = inlined_call_operand.vmem [shape: bf16[2,64], index: 3, kind: input, shape index: {}]
  %s4 = inlined_call_operand.vmem [shape: f32[64,4], index: 4, kind: input, shape index: {}]
  %s5 = inlined_call_operand.vmem [shape: f32[2,128], index: 5, kind: output, shape index: {}]
  %s6 = sld [smem:[#allocation0]]
  $region30: #{mbpo_reward_forward.1} parent=0
    _
  %s8 = ssub.s32 1, %s6
  %s9 = scalar_select 0, %s8, %s6
  // Predicated region
  $region2: #{mbpo_reward_forward.1} parent=0 // pred_check
    _
  $region3: #{mbpo_reward_forward.1} parent=0 // pred_check_branch
    %11 = sbr.rel (0) target = $region5
  $region4: #{mbpo_reward_forward.1} parent=0 // pred_region
    _
  $region5: #{mbpo_reward_forward.1} parent=0 // pred_fallthru
    _
  // Predicated region
  $region6: #{mbpo_reward_forward.1} parent=0 // pred_check
    _
  $region7: #{mbpo_reward_forward.1} parent=0 // pred_check_branch
    %13 = sbr.rel (0) target = $region9
  $region8: #{mbpo_reward_forward.1} parent=0 // pred_region
    _
  $region9: #{mbpo_reward_forward.1} parent=0 // pred_fallthru
    _
  // Predicated region
  $region10: #{mbpo_reward_forward.1} parent=0 // pred_check
    _
  $region11: #{mbpo_reward_forward.1} parent=0 // pred_check_branch
    %15 = sbr.rel (0) target = $region13
  $region12: #{mbpo_reward_forward.1} parent=0 // pred_region
    _
  $region13: #{mbpo_reward_forward.1} parent=0 // pred_fallthru
    _
  // Predicated region
  $region14: #{mbpo_reward_forward.1} parent=0 // pred_check
    _
  $region15: #{mbpo_reward_forward.1} parent=0 // pred_check_branch
    %17 = sbr.rel (0) target = $region17
  $region16: #{mbpo_reward_forward.1} parent=0 // pred_region
    _
  $region17: #{mbpo_reward_forward.1} parent=0 // pred_fallthru
    _
  // Predicated region
  $region18: #{mbpo_reward_forward.1} parent=0 // pred_check
    _
  $region19: #{mbpo_reward_forward.1} parent=0 // pred_check_branch
    %19 = sbr.rel (0) target = $region21
  $region20: #{mbpo_reward_forward.1} parent=0 // pred_region
    _
  $region21: #{mbpo_reward_forward.1} parent=0 // pred_fallthru
    _
  %v21 = vld [vmem:[%s4] sm:$0xff]
  %v22 = vld [vmem:[%s4 + $0x8] sm:$0xff]
  %v23 = vld [vmem:[%s4 + $0x10] sm:$0xff]
  %v24 = vld [vmem:[%s4 + $0x18] sm:$0xff]
  %v25 = vld [vmem:[%s4 + $0x20] sm:$0xff]
  %v26 = vld [vmem:[%s4 + $0x28] sm:$0xff]
  %v27 = vld [vmem:[%s4 + $0x30] sm:$0xff]
  %v28 = vld [vmem:[%s4 + $0x38] sm:$0xff]
  %v29 = vld [vmem:[%s1] sm:$0xf]
  %v30 = vld [vmem:[%s1 + $0x4] sm:$0xf]
  %v31 = vld [vmem:[%s1 + $0x8] sm:$0xf]
  %v32 = vld [vmem:[%s1 + $0xc] sm:$0xf]
  %v33 = vld [vmem:[%s1 + $0x10] sm:$0xf]
  %v34 = vld [vmem:[%s1 + $0x14] sm:$0xf]
  %v35 = vld [vmem:[%s1 + $0x18] sm:$0xf]
  %v36 = vld [vmem:[%s1 + $0x1c] sm:$0xf]
  %v37 = vld [vmem:[%s0] sm:$0x3]
  %39 = vset.pattern.permute.xlu0 0
  %40 = vperm.xlu0 %39, %v21
  %v41 = vpop.permute.xlu0 %40
  %44 = vset.pattern.permute.xlu0 0
  %45 = vperm.xlu0 %44, %v22
  %v46 = vpop.permute.xlu0 %45
  %49 = vset.pattern.permute.xlu0 0
  %50 = vperm.xlu0 %49, %v23
  %v51 = vpop.permute.xlu0 %50
  %54 = vset.pattern.permute.xlu0 0
  %55 = vperm.xlu0 %54, %v24
  %v56 = vpop.permute.xlu0 %55
  %59 = vset.pattern.permute.xlu0 0
  %60 = vperm.xlu0 %59, %v25
  %v61 = vpop.permute.xlu0 %60
  %64 = vset.pattern.permute.xlu0 0
  %65 = vperm.xlu0 %64, %v26
  %v66 = vpop.permute.xlu0 %65
  %69 = vset.pattern.permute.xlu0 0
  %70 = vperm.xlu0 %69, %v27
  %v71 = vpop.permute.xlu0 %70
  %74 = vset.pattern.permute.xlu0 0
  %75 = vperm.xlu0 %74, %v28
  %v76 = vpop.permute.xlu0 %75
  %v86 = vunpack.c.l.b16 %v29
  %v87 = vunpack.c.l.b16 %v30
  %v88 = vunpack.c.l.b16 %v31
  %v89 = vunpack.c.l.b16 %v32
  %v90 = vunpack.c.l.b16 %v33
  %v91 = vunpack.c.l.b16 %v34
  %v92 = vunpack.c.l.b16 %v35
  %v93 = vunpack.c.l.b16 %v36
  %v94 = vpack.c.b16 %v87, %v86
  %v95 = vpack.c.b16 %v89, %v88
  %v96 = vpack.c.b16 %v91, %v90
  %v97 = vpack.c.b16 %v93, %v92
  %vm98 = vcmask 31744
  %v100 = vsel %vm98, %v94, 0
  %v103 = vsel %vm98, %v95, 0
  %v106 = vsel %vm98, %v96, 0
  %v109 = vsel %vm98, %v97, 0
  %vm111 = vcmask 1041408
  %v113 = vsel %vm111, %v37, 0
  %115 = vmatprep.subr.bf16.mxu0 0
  %116 = vmatpush1.bf16.msra.mxu0 %v113
  %117 = vmatprep.subr.bf16.mxu0 0
  %118 = vmatpush1.bf16.msra.mxu0 0
  %119 = vmatprep.subr.bf16.mxu0 0
  %120 = vmatpush1.bf16.msra.mxu0 0
  %121 = vmatprep.subr.bf16.mxu0 0
  %122 = vmatpush1.bf16.msra.mxu0 0
  %123 = vmatprep.subr.bf16.mxu0 0
  %124 = vmatpush1.bf16.msra.mxu0 0
  %125 = vmatprep.subr.bf16.mxu0 0
  %126 = vmatpush1.bf16.msra.mxu0 0
  %127 = vmatprep.subr.bf16.mxu0 0
  %128 = vmatpush1.bf16.msra.mxu0 0
  %129 = vmatprep.subr.bf16.mxu0 0
  %130 = vmatpush1.bf16.msra.mxu0 0
  %131 = vmatprep.subr.bf16.mxu0 0
  %132 = vmatpush1.bf16.msra.mxu0 0
  %133 = vmatprep.subr.bf16.mxu0 0
  %134 = vmatpush1.bf16.msra.mxu0 0
  %135 = vmatprep.subr.bf16.mxu0 0
  %136 = vmatpush1.bf16.msra.mxu0 0
  %137 = vmatprep.subr.bf16.mxu0 0
  %138 = vmatpush1.bf16.msra.mxu0 0
  %139 = vmatprep.subr.bf16.mxu0 0
  %140 = vmatpush1.bf16.msra.mxu0 0
  %141 = vmatprep.subr.bf16.mxu0 0
  %142 = vmatpush1.bf16.msra.mxu0 0
  %143 = vmatprep.subr.bf16.mxu0 0
  %144 = vmatpush1.bf16.msra.mxu0 0
  %145 = vmatprep.subr.bf16.mxu0 0
  %146 = vmatpush1.bf16.msra.mxu0 0
  %147 = vmatprep.mubr.bf16.mxu0 0
  %148 = vmatmul.mubr.bf16.gmra.mrb[0].mxu0 %v100
  %v149 = vpop.f32.mrb[0].mxu0
  %v150 = vadd.f32 %v41, %v149
  %v151 = vpop.f32.mrb[0].mxu0
  %v152 = vpop.f32.mrb[0].mxu0
  %v153 = vadd.f32 %v46, %v152
  %v154 = vpop.f32.mrb[0].mxu0
  %155 = vmatprep.mubr.bf16.mxu0 0
  %156 = vmatmul.mubr.bf16.gmra.mrb[0].mxu0 %v103
  %v157 = vpop.f32.mrb[0].mxu0
  %v158 = vadd.f32 %v51, %v157
  %v159 = vpop.f32.mrb[0].mxu0
  %v160 = vpop.f32.mrb[0].mxu0
  %v161 = vadd.f32 %v56, %v160
  %v162 = vpop.f32.mrb[0].mxu0
  %163 = vmatprep.mubr.bf16.mxu0 0
  %164 = vmatmul.mubr.bf16.gmra.mrb[0].mxu0 %v106
  %v165 = vpop.f32.mrb[0].mxu0
  %v166 = vadd.f32 %v61, %v165
  %v167 = vpop.f32.mrb[0].mxu0
  %v168 = vpop.f32.mrb[0].mxu0
  %v169 = vadd.f32 %v66, %v168
  %v170 = vpop.f32.mrb[0].mxu0
  %171 = vmatprep.mubr.bf16.mxu0 0
  %172 = vmatmul.mubr.bf16.gmra.mrb[0].mxu0 %v109
  %v173 = vpop.f32.mrb[0].mxu0
  %v174 = vadd.f32 %v71, %v173
  %v175 = vpop.f32.mrb[0].mxu0
  %v176 = vpop.f32.mrb[0].mxu0
  %v177 = vadd.f32 %v76, %v176
  %v178 = vpop.f32.mrb[0].mxu0
  %179 = vdwg.mxu0
  %v180 = vmax.f32 %v150, 0.0
  %v181 = vmax.f32 %v153, 0.0
  %v182 = vmax.f32 %v158, 0.0
  %v183 = vmax.f32 %v161, 0.0
  %v184 = vmax.f32 %v166, 0.0
  %v185 = vmax.f32 %v169, 0.0
  %v186 = vmax.f32 %v174, 0.0
  %v187 = vmax.f32 %v177, 0.0
  %v188 = vld [vmem:[%s2] sm:$0xf]
  %v189 = vld [vmem:[%s2 + $0x4] sm:$0xf]
  %v190 = vld [vmem:[%s2 + $0x8] sm:$0xf]
  %v191 = vld [vmem:[%s2 + $0xc] sm:$0xf]
  %v192 = vld [vmem:[%s2 + $0x10] sm:$0xf]
  %v193 = vld [vmem:[%s2 + $0x14] sm:$0xf]
  %v194 = vld [vmem:[%s2 + $0x18] sm:$0xf]
  %v195 = vld [vmem:[%s2 + $0x1c] sm:$0xf]
  %v196 = vpack.c.bf16 %v181, %v180
  %v197 = vpack.c.bf16 %v183, %v182
  %v198 = vpack.c.bf16 %v185, %v184
  %v199 = vpack.c.bf16 %v187, %v186
  %200 = vset.pattern.permute.xlu0 1
  %201 = vperm.xlu0 %200, %v21
  %v202 = vpop.permute.xlu0 %201
  %204 = vset.pattern.permute.xlu0 1
  %205 = vperm.xlu0 %204, %v22
  %v206 = vpop.permute.xlu0 %205
  %208 = vset.pattern.permute.xlu0 1
  %209 = vperm.xlu0 %208, %v23
  %v210 = vpop.permute.xlu0 %209
  %212 = vset.pattern.permute.xlu0 1
  %213 = vperm.xlu0 %212, %v24
  %v214 = vpop.permute.xlu0 %213
  %216 = vset.pattern.permute.xlu0 1
  %217 = vperm.xlu0 %216, %v25
  %v218 = vpop.permute.xlu0 %217
  %220 = vset.pattern.permute.xlu0 1
  %221 = vperm.xlu0 %220, %v26
  %v222 = vpop.permute.xlu0 %221
  %224 = vset.pattern.permute.xlu0 1
  %225 = vperm.xlu0 %224, %v27
  %v226 = vpop.permute.xlu0 %225
  %228 = vset.pattern.permute.xlu0 1
  %229 = vperm.xlu0 %228, %v28
  %v230 = vpop.permute.xlu0 %229
  %v240 = vunpack.c.l.b16 %v188
  %v241 = vunpack.c.l.b16 %v189
  %v242 = vunpack.c.l.b16 %v190
  %v243 = vunpack.c.l.b16 %v191
  %v244 = vunpack.c.l.b16 %v192
  %v245 = vunpack.c.l.b16 %v193
  %v246 = vunpack.c.l.b16 %v194
  %v247 = vunpack.c.l.b16 %v195
  %v248 = vpack.c.b16 %v241, %v240
  %v249 = vpack.c.b16 %v243, %v242
  %v250 = vpack.c.b16 %v245, %v244
  %v251 = vpack.c.b16 %v247, %v246
  %vm252 = vcmask 523264
  %v254 = vsel %vm252, %v248, 0
  %v257 = vsel %vm252, %v249, 0
  %v260 = vsel %vm252, %v250, 0
  %v263 = vsel %vm252, %v251, 0
  %265 = vmatprep.subr.bf16.mxu0 0
  %266 = vmatpush1.bf16.msra.mxu0 %v196
  %267 = vmatprep.subr.bf16.mxu0 0
  %268 = vmatpush1.bf16.msra.mxu0 %v197
  %269 = vmatprep.subr.bf16.mxu0 0
  %270 = vmatpush1.bf16.msra.mxu0 %v198
  %271 = vmatprep.subr.bf16.mxu0 0
  %272 = vmatpush1.bf16.msra.mxu0 %v199
  %273 = vmatprep.subr.bf16.mxu0 0
  %274 = vmatpush1.bf16.msra.mxu0 0
  %275 = vmatprep.subr.bf16.mxu0 0
  %276 = vmatpush1.bf16.msra.mxu0 0
  %277 = vmatprep.subr.bf16.mxu0 0
  %278 = vmatpush1.bf16.msra.mxu0 0
  %279 = vmatprep.subr.bf16.mxu0 0
  %280 = vmatpush1.bf16.msra.mxu0 0
  %281 = vmatprep.subr.bf16.mxu0 0
  %282 = vmatpush1.bf16.msra.mxu0 0
  %283 = vmatprep.subr.bf16.mxu0 0
  %284 = vmatpush1.bf16.msra.mxu0 0
  %285 = vmatprep.subr.bf16.mxu0 0
  %286 = vmatpush1.bf16.msra.mxu0 0
  %287 = vmatprep.subr.bf16.mxu0 0
  %288 = vmatpush1.bf16.msra.mxu0 0
  %289 = vmatprep.subr.bf16.mxu0 0
  %290 = vmatpush1.bf16.msra.mxu0 0
  %291 = vmatprep.subr.bf16.mxu0 0
  %292 = vmatpush1.bf16.msra.mxu0 0
  %293 = vmatprep.subr.bf16.mxu0 0
  %294 = vmatpush1.bf16.msra.mxu0 0
  %295 = vmatprep.subr.bf16.mxu0 0
  %296 = vmatpush1.bf16.msra.mxu0 0
  %297 = vmatprep.mubr.bf16.mxu0 0
  %298 = vmatmul.mubr.bf16.gmra.mrb[0].mxu0 %v254
  %v299 = vpop.f32.mrb[0].mxu0
  %v300 = vadd.f32 %v202, %v299
  %v301 = vpop.f32.mrb[0].mxu0
  %v302 = vpop.f32.mrb[0].mxu0
  %v303 = vadd.f32 %v206, %v302
  %v304 = vpop.f32.mrb[0].mxu0
  %305 = vmatprep.mubr.bf16.mxu0 0
  %306 = vmatmul.mubr.bf16.gmra.mrb[0].mxu0 %v257
  %v307 = vpop.f32.mrb[0].mxu0
  %v308 = vadd.f32 %v210, %v307
  %v309 = vpop.f32.mrb[0].mxu0
  %v310 = vpop.f32.mrb[0].mxu0
  %v311 = vadd.f32 %v214, %v310
  %v312 = vpop.f32.mrb[0].mxu0
  %313 = vmatprep.mubr.bf16.mxu0 0
  %314 = vmatmul.mubr.bf16.gmra.mrb[0].mxu0 %v260
  %v315 = vpop.f32.mrb[0].mxu0
  %v316 = vadd.f32 %v218, %v315
  %v317 = vpop.f32.mrb[0].mxu0
  %v318 = vpop.f32.mrb[0].mxu0
  %v319 = vadd.f32 %v222, %v318
  %v320 = vpop.f32.mrb[0].mxu0
  %321 = vmatprep.mubr.bf16.mxu0 0
  %322 = vmatmul.mubr.bf16.gmra.mrb[0].mxu0 %v263
  %v323 = vpop.f32.mrb[0].mxu0
  %v324 = vadd.f32 %v226, %v323
  %v325 = vpop.f32.mrb[0].mxu0
  %v326 = vpop.f32.mrb[0].mxu0
  %v327 = vadd.f32 %v230, %v326
  %v328 = vpop.f32.mrb[0].mxu0
  %329 = vdwg.mxu0
  %v330 = vmax.f32 %v300, 0.0
  %v331 = vmax.f32 %v303, 0.0
  %v332 = vmax.f32 %v308, 0.0
  %v333 = vmax.f32 %v311, 0.0
  %v334 = vmax.f32 %v316, 0.0
  %v335 = vmax.f32 %v319, 0.0
  %v336 = vmax.f32 %v324, 0.0
  %v337 = vmax.f32 %v327, 0.0
  %s338 = scalar_lea.vmem %s2, 32
  %v339 = vld [vmem:[%s338] sm:$0xf]
  %v340 = vld [vmem:[%s338 + $0x4] sm:$0xf]
  %v341 = vld [vmem:[%s338 + $0x8] sm:$0xf]
  %v342 = vld [vmem:[%s338 + $0xc] sm:$0xf]
  %v343 = vld [vmem:[%s338 + $0x10] sm:$0xf]
  %v344 = vld [vmem:[%s338 + $0x14] sm:$0xf]
  %v345 = vld [vmem:[%s338 + $0x18] sm:$0xf]
  %v346 = vld [vmem:[%s338 + $0x1c] sm:$0xf]
  %v347 = vpack.c.bf16 %v331, %v330
  %v348 = vpack.c.bf16 %v333, %v332
  %v349 = vpack.c.bf16 %v335, %v334
  %v350 = vpack.c.bf16 %v337, %v336
  %351 = vset.pattern.permute.xlu0 2
  %352 = vperm.xlu0 %351, %v21
  %v353 = vpop.permute.xlu0 %352
  %355 = vset.pattern.permute.xlu0 2
  %356 = vperm.xlu0 %355, %v22
  %v357 = vpop.permute.xlu0 %356
  %359 = vset.pattern.permute.xlu0 2
  %360 = vperm.xlu0 %359, %v23
  %v361 = vpop.permute.xlu0 %360
  %363 = vset.pattern.permute.xlu0 2
  %364 = vperm.xlu0 %363, %v24
  %v365 = vpop.permute.xlu0 %364
  %367 = vset.pattern.permute.xlu0 2
  %368 = vperm.xlu0 %367, %v25
  %v369 = vpop.permute.xlu0 %368
  %371 = vset.pattern.permute.xlu0 2
  %372 = vperm.xlu0 %371, %v26
  %v373 = vpop.permute.xlu0 %372
  %375 = vset.pattern.permute.xlu0 2
  %376 = vperm.xlu0 %375, %v27
  %v377 = vpop.permute.xlu0 %376
  %379 = vset.pattern.permute.xlu0 2
  %380 = vperm.xlu0 %379, %v28
  %v381 = vpop.permute.xlu0 %380
  %v391 = vunpack.c.l.b16 %v339
  %v392 = vunpack.c.l.b16 %v340
  %v393 = vunpack.c.l.b16 %v341
  %v394 = vunpack.c.l.b16 %v342
  %v395 = vunpack.c.l.b16 %v343
  %v396 = vunpack.c.l.b16 %v344
  %v397 = vunpack.c.l.b16 %v345
  %v398 = vunpack.c.l.b16 %v346
  %v399 = vpack.c.b16 %v392, %v391
  %v400 = vpack.c.b16 %v394, %v393
  %v401 = vpack.c.b16 %v396, %v395
  %v402 = vpack.c.b16 %v398, %v397
  %v404 = vsel %vm252, %v399, 0
  %v407 = vsel %vm252, %v400, 0
  %v410 = vsel %vm252, %v401, 0
  %v413 = vsel %vm252, %v402, 0
  %415 = vmatprep.subr.bf16.mxu0 0
  %416 = vmatpush1.bf16.msra.mxu0 %v347
  %417 = vmatprep.subr.bf16.mxu0 0
  %418 = vmatpush1.bf16.msra.mxu0 %v348
  %419 = vmatprep.subr.bf16.mxu0 0
  %420 = vmatpush1.bf16.msra.mxu0 %v349
  %421 = vmatprep.subr.bf16.mxu0 0
  %422 = vmatpush1.bf16.msra.mxu0 %v350
  %423 = vmatprep.subr.bf16.mxu0 0
  %424 = vmatpush1.bf16.msra.mxu0 0
  %425 = vmatprep.subr.bf16.mxu0 0
  %426 = vmatpush1.bf16.msra.mxu0 0
  %427 = vmatprep.subr.bf16.mxu0 0
  %428 = vmatpush1.bf16.msra.mxu0 0
  %429 = vmatprep.subr.bf16.mxu0 0
  %430 = vmatpush1.bf16.msra.mxu0 0
  %431 = vmatprep.subr.bf16.mxu0 0
  %432 = vmatpush1.bf16.msra.mxu0 0
  %433 = vmatprep.subr.bf16.mxu0 0
  %434 = vmatpush1.bf16.msra.mxu0 0
  %435 = vmatprep.subr.bf16.mxu0 0
  %436 = vmatpush1.bf16.msra.mxu0 0
  %437 = vmatprep.subr.bf16.mxu0 0
  %438 = vmatpush1.bf16.msra.mxu0 0
  %439 = vmatprep.subr.bf16.mxu0 0
  %440 = vmatpush1.bf16.msra.mxu0 0
  %441 = vmatprep.subr.bf16.mxu0 0
  %442 = vmatpush1.bf16.msra.mxu0 0
  %443 = vmatprep.subr.bf16.mxu0 0
  %444 = vmatpush1.bf16.msra.mxu0 0
  %445 = vmatprep.subr.bf16.mxu0 0
  %446 = vmatpush1.bf16.msra.mxu0 0
  %447 = vmatprep.mubr.bf16.mxu0 0
  %448 = vmatmul.mubr.bf16.gmra.mrb[0].mxu0 %v404
  %v449 = vpop.f32.mrb[0].mxu0
  %v450 = vadd.f32 %v353, %v449
  %v451 = vpop.f32.mrb[0].mxu0
  %v452 = vpop.f32.mrb[0].mxu0
  %v453 = vadd.f32 %v357, %v452
  %v454 = vpop.f32.mrb[0].mxu0
  %455 = vmatprep.mubr.bf16.mxu0 0
  %456 = vmatmul.mubr.bf16.gmra.mrb[0].mxu0 %v407
  %v457 = vpop.f32.mrb[0].mxu0
  %v458 = vadd.f32 %v361, %v457
  %v459 = vpop.f32.mrb[0].mxu0
  %v460 = vpop.f32.mrb[0].mxu0
  %v461 = vadd.f32 %v365, %v460
  %v462 = vpop.f32.mrb[0].mxu0
  %463 = vmatprep.mubr.bf16.mxu0 0
  %464 = vmatmul.mubr.bf16.gmra.mrb[0].mxu0 %v410
  %v465 = vpop.f32.mrb[0].mxu0
  %v466 = vadd.f32 %v369, %v465
  %v467 = vpop.f32.mrb[0].mxu0
  %v468 = vpop.f32.mrb[0].mxu0
  %v469 = vadd.f32 %v373, %v468
  %v470 = vpop.f32.mrb[0].mxu0
  %471 = vmatprep.mubr.bf16.mxu0 0
  %472 = vmatmul.mubr.bf16.gmra.mrb[0].mxu0 %v413
  %v473 = vpop.f32.mrb[0].mxu0
  %v474 = vadd.f32 %v377, %v473
  %v475 = vpop.f32.mrb[0].mxu0
  %v476 = vpop.f32.mrb[0].mxu0
  %v477 = vadd.f32 %v381, %v476
  %v478 = vpop.f32.mrb[0].mxu0
  %479 = vdwg.mxu0
  %v480 = vmax.f32 %v450, 0.0
  %v481 = vmax.f32 %v453, 0.0
  %v482 = vmax.f32 %v458, 0.0
  %v483 = vmax.f32 %v461, 0.0
  %v484 = vmax.f32 %v466, 0.0
  %v485 = vmax.f32 %v469, 0.0
  %v486 = vmax.f32 %v474, 0.0
  %v487 = vmax.f32 %v477, 0.0
  %v488 = vld [vmem:[%s3] sm:$0x1]
  %v489 = vpack.c.bf16 %v481, %v480
  %v490 = vpack.c.bf16 %v483, %v482
  %v491 = vpack.c.bf16 %v485, %v484
  %v492 = vpack.c.bf16 %v487, %v486
  %493 = vset.pattern.permute.xlu0 3
  %494 = vperm.xlu0 %493, %v21
  %v495 = vpop.permute.xlu0 %494
  %v498 = vsel %vm252, %v488, 0
  %500 = vmatprep.subr.bf16.mxu0 0
  %501 = vmatpush1.bf16.msra.mxu0 %v489
  %502 = vmatprep.subr.bf16.mxu0 0
  %503 = vmatpush1.bf16.msra.mxu0 %v490
  %504 = vmatprep.subr.bf16.mxu0 0
  %505 = vmatpush1.bf16.msra.mxu0 %v491
  %506 = vmatprep.subr.bf16.mxu0 0
  %507 = vmatpush1.bf16.msra.mxu0 %v492
  %508 = vmatprep.subr.bf16.mxu0 0
  %509 = vmatpush1.bf16.msra.mxu0 0
  %510 = vmatprep.subr.bf16.mxu0 0
  %511 = vmatpush1.bf16.msra.mxu0 0
  %512 = vmatprep.subr.bf16.mxu0 0
  %513 = vmatpush1.bf16.msra.mxu0 0
  %514 = vmatprep.subr.bf16.mxu0 0
  %515 = vmatpush1.bf16.msra.mxu0 0
  %516 = vmatprep.subr.bf16.mxu0 0
  %517 = vmatpush1.bf16.msra.mxu0 0
  %518 = vmatprep.subr.bf16.mxu0 0
  %519 = vmatpush1.bf16.msra.mxu0 0
  %520 = vmatprep.subr.bf16.mxu0 0
  %521 = vmatpush1.bf16.msra.mxu0 0
  %522 = vmatprep.subr.bf16.mxu0 0
  %523 = vmatpush1.bf16.msra.mxu0 0
  %524 = vmatprep.subr.bf16.mxu0 0
  %525 = vmatpush1.bf16.msra.mxu0 0
  %526 = vmatprep.subr.bf16.mxu0 0
  %527 = vmatpush1.bf16.msra.mxu0 0
  %528 = vmatprep.subr.bf16.mxu0 0
  %529 = vmatpush1.bf16.msra.mxu0 0
  %530 = vmatprep.subr.bf16.mxu0 0
  %531 = vmatpush1.bf16.msra.mxu0 0
  %532 = vmatprep.mubr.bf16.mxu0 0
  %533 = vmatmul.mubr.bf16.gmra.mrb[0].mxu0 %v498
  %v534 = vpop.f32.mrb[0].mxu0
  %v535 = vadd.f32 %v495, %v534
  %v536 = vpop.f32.mrb[0].mxu0
  %v537 = vpop.f32.mrb[0].mxu0
  %v538 = vpop.f32.mrb[0].mxu0
  %539 = vdwg.mxu0
  %v540 = vlaneseq
  %v541 = vshrl.u32 %v540, 7
  %vm542 = vcmp.eq.s32.totalorder %v541, 0
  %vm543 = vcmp.gt.f32.partialorder %v535, 20.0
  %v544 = vmin.f32 %v535, 20.0
  %v545 = vmul.f32 %v544, 1.442695
  %v546 = vpow.pop %v545
  %v547 = vadd.f32 %v546, 1.0
  %v548 = vlog2.pop %v547
  %v549 = vmul.f32 %v548, 0.6931472
  %v550 = vmul.f32 -0.5, %v546
  %v551 = vadd.f32 %v550, 1.0
  %v552 = vmul.f32 %v551, %v546
  %v553 = vand.u32 2147483647, %v546
  %vm554 = vcmp.lt.f32.partialorder %v553, 0.0004427343
  %v555 = vsel %vm554, %v552, %v549
  %v556 = vsel %vm543, %v535, %v555
  %v557 = vsel %vm542, %v535, %v556
  %558 = vst [vmem:[%s5] sm:$0x3] %v557
  // Predicated region
  $region22: #{mbpo_reward_forward.1} parent=0 // pred_check
    _
  $region23: #{mbpo_reward_forward.1} parent=0 // pred_check_branch
    %560 = sbr.rel (0) target = $region25
  $region24: #{mbpo_reward_forward.1} parent=0 // pred_region
    _
  $region25: #{mbpo_reward_forward.1} parent=0 // pred_fallthru
    _
  // Predicated region
  $region26: #{mbpo_reward_forward.1} parent=0 // pred_check
    _
  $region27: #{mbpo_reward_forward.1} parent=0 // pred_check_branch
    %562 = sbr.rel (0) target = $region29
  $region28: #{mbpo_reward_forward.1} parent=0 // pred_region
    _
  $region29: #{mbpo_reward_forward.1} parent=0 // pred_fallthru
    _

</llo_original>
